<compile_context>
chip_gen: v6e
topology: v6e:2x2x1
jax: 0.10.0
libtpu: 0.0.40
codegen_flags: <defaults>
</compile_context>

<pallas_src>
import functools

import jax
import jax.numpy as jnp
from jax import lax
from jax.experimental import pallas as pl
from jax.experimental.pallas import tpu as pltpu

NEG_SLOPE = 0.01   # nn.LeakyReLU() default negative_slope
BN_EPS = 1e-5      # nn.BatchNorm2d default eps


def _conv_block_kernel(x_ref, w1_ref, b1_ref, w2_ref, b2_ref, o_ref,
                       sh_ref, *, img_h):
    # x_ref : (M, W*Cin)    bf16, M = images_per_step * H, channel-minor rows
    # w1_ref: (W*Cin,  3*W*Cout) bf16  [tap0 | tap1 | tap2] banded, BN scale folded
    # b1_ref: (1, W*Cout)   f32   folded conv-bias + BN shift
    # w2_ref: (W*Cout, 3*W*Cout) bf16
    # b2_ref: (1, W*Cout)   f32
    # o_ref : (M, W*Cout)   f32
    # sh_ref: (M, W*Cout)   f32 scratch for the +/-1-row tap shifts
    M = x_ref.shape[0]
    Wco = o_ref.shape[1]

    # Per-row image-boundary masks (images are stacked along rows, img_h each).
    ri = lax.broadcasted_iota(jnp.int32, (M, Wco), 0)
    not_top = (ri % img_h) != 0             # row is not the first row of its image
    not_bot = (ri % img_h) != (img_h - 1)   # row is not the last row of its image
    zero_row = jnp.zeros((1, Wco), jnp.float32)

    def conv3x3(lhs_bf16, w_ref, b_ref):
        # One lane-dense MXU dot: (M, K) @ (K, 3*Wco) -> [p0 | p1 | p2], f32 acc.
        big = jnp.dot(lhs_bf16, w_ref[...], preferred_element_type=jnp.float32)
        p0 = big[:, 0:Wco]            # tap kh=0  -> needs source row i-1
        p1 = big[:, Wco:2 * Wco]      # tap kh=1  -> row i
        p2 = big[:, 2 * Wco:3 * Wco]  # tap kh=2  -> row i+1
        # out[i] = p0[i-1]*[i%H!=0] + p1[i] + p2[i+1]*[i%H!=H-1]
        sh_ref[0:1, :] = zero_row
        sh_ref[1:M, :] = p0[0:M - 1, :]
        acc = p1 + jnp.where(not_top, sh_ref[...], 0.0)
        sh_ref[M - 1:M, :] = zero_row
        sh_ref[0:M - 1, :] = p2[1:M, :]
        acc = acc + jnp.where(not_bot, sh_ref[...], 0.0)
        acc = acc + b_ref[...]                              # folded conv-bias + BN shift
        return jnp.where(acc >= 0, acc, NEG_SLOPE * acc)    # LeakyReLU

    y = conv3x3(x_ref[...], w1_ref, b1_ref)
    # Dropout is identity in eval mode.
    # TODO(synk): training-mode dropout mask / BN batch statistics not implemented.
    z = conv3x3(y.astype(jnp.bfloat16), w2_ref, b2_ref)     # single bf16 cast
    o_ref[...] = z


def _band_conv_weights(w_hwio, width):
    """(3, 3, Ci, Co) HWIO kernel -> (3, W*Ci, W*Co) banded matrices.

    big[kh, wi*Ci + ci, wo*Co + co] = w[kh, wi - wo + 1, ci, co] inside the band,
    0 outside, so  sum_kh  x_padH[kh:kh+H, :] @ big[kh]  is the SAME-padded 3x3
    convolution in channel-minor (H, W*C) layout (W-padding implicit).
    """
    _, _, ci, co = w_hwio.shape
    wi = jnp.arange(width)[:, None]
    wo = jnp.arange(width)[None, :]
    kw = wi - wo + 1
    valid = (kw >= 0) & (kw <= 2)
    big = w_hwio[:, jnp.clip(kw, 0, 2), :, :]                 # (3, W, W, Ci, Co)
    big = big * valid[None, :, :, None, None].astype(w_hwio.dtype)
    big = jnp.transpose(big, (0, 1, 3, 2, 4))                 # (3, W, Ci, W, Co)
    return big.reshape(3, width * ci, width * co)


def fold_bn(conv_bias, gamma, beta, running_mean, running_var):
    """Fold conv bias + eval-mode BatchNorm into per-channel scale & bias."""
    scale = gamma / jnp.sqrt(running_var + BN_EPS)
    bias = beta + scale * (conv_bias - running_mean)
    return scale, bias


def prepare_conv_block_params(p, width):
    """Build banded, BN-scale-folded bf16 weights + folded f32 biases.

    Weights are static in eval mode: call this ONCE and reuse the result for
    every forward call (avoids re-tracing the band construction per call).
    """
    s1, b1 = fold_bn(p["cb1"], p["g1"], p["bt1"], p["m1"], p["v1"])
    s2, b2 = fold_bn(p["cb2"], p["g2"], p["bt2"], p["m2"], p["v2"])

    def make(w_hwio, scale):
        band = _band_conv_weights(w_hwio.astype(jnp.float32), width)  # (3, K, Wco)
        st = jnp.tile(scale, width)                                   # (Wco,)
        band = band * st[None, None, :]          # fold BN scale in f32, pre-cast
        k, wco = band.shape[1], band.shape[2]
        # [tap0 | tap1 | tap2] along output columns -> (K, 3*Wco), bf16.
        return jnp.transpose(band, (1, 0, 2)).reshape(k, 3 * wco).astype(jnp.bfloat16)

    return {
        "w1": make(p["w1"], s1),
        "b1": jnp.tile(b1, width)[None, :].astype(jnp.float32),
        "w2": make(p["w2"], s2),
        "b2": jnp.tile(b2, width)[None, :].astype(jnp.float32),
    }


def _pick_images_per_step(n_img, img_h, target_m=256, max_m=1024):
    """Images per grid step: grow the matmul M-dim toward target_m rows."""
    candidates = [nb for nb in range(1, n_img + 1)
                  if n_img % nb == 0 and (nb == n_img or (nb * img_h) % 8 == 0)]
    for nb in candidates:
        if nb * img_h >= target_m:
            return nb
    under = [nb for nb in candidates if nb * img_h <= max_m]
    return under[-1] if under else candidates[0]


def conv_block_apply_cm(x_cm, params, *, img_h, images_per_step=None):
    """Channel-minor entry point: x_cm is (N*H, W*Cin); returns (N*H, W*Cout) f32.

    Chained ConvBlocks should stay in this layout (and ideally pass bf16) so the
    NCHW transposes only happen at the model boundary."""
    NH, Wci = x_cm.shape
    assert NH % img_h == 0
    n_img = NH // img_h
    Wco = params["b1"].shape[1]
    if images_per_step is None:
        images_per_step = _pick_images_per_step(n_img, img_h)
    M = images_per_step * img_h
    grid = (n_img // images_per_step,)

    x_bf16 = x_cm.astype(jnp.bfloat16)   # single input cast; halves x HBM->VMEM bytes

    flops = 2 * NH * 3 * Wco * (Wci + Wco)
    bytes_accessed = (NH * Wci * 2 + NH * Wco * 4
                      + (Wci * 3 * Wco + Wco * 3 * Wco) * 2 + 2 * Wco * 4)
    cost = pl.CostEstimate(flops=flops, transcendentals=0,
                           bytes_accessed=bytes_accessed)

    kernel = functools.partial(_conv_block_kernel, img_h=img_h)

    return pl.pallas_call(
        kernel,
        out_shape=jax.ShapeDtypeStruct((NH, Wco), jnp.float32),
        grid_spec=pltpu.PrefetchScalarGridSpec(
            num_scalar_prefetch=0,
            grid=grid,
            in_specs=[
                pl.BlockSpec((M, Wci), lambda i: (i, 0)),
                pl.BlockSpec((Wci, 3 * Wco), lambda i: (0, 0)),
                pl.BlockSpec((1, Wco), lambda i: (0, 0)),
                pl.BlockSpec((Wco, 3 * Wco), lambda i: (0, 0)),
                pl.BlockSpec((1, Wco), lambda i: (0, 0)),
            ],
            out_specs=pl.BlockSpec((M, Wco), lambda i: (i, 0)),
            scratch_shapes=[
                pltpu.VMEM((M, Wco), jnp.float32),   # +/-1-row tap-shift staging
            ],
        ),
        compiler_params=pltpu.CompilerParams(
            dimension_semantics=("parallel",),
            vmem_limit_bytes=32 * 1024 * 1024,
        ),
        cost_estimate=cost,
    )(x_bf16, params["w1"], params["b1"], params["w2"], params["b2"])


def conv_block_pallas(x_nchw, params):
    """Public NCHW entry point matching the PyTorch module's interface."""
    N, Cin, H, W = x_nchw.shape
    Wco = params["b1"].shape[1]
    Cout = Wco // W
    # Boundary-only layout conversion; chained blocks should stay channel-minor.
    x_cm = jnp.transpose(x_nchw, (0, 2, 3, 1)).reshape(N * H, W * Cin)
    out = conv_block_apply_cm(x_cm, params, img_h=H)
    return jnp.transpose(out.reshape(N, H, W, Cout), (0, 3, 1, 2))


def make_params(key, cin, cout):
    ks = jax.random.split(key, 12)
    return {
        "w1": 0.1 * jax.random.normal(ks[0], (3, 3, cin, cout), jnp.float32),
        "cb1": 0.1 * jax.random.normal(ks[1], (cout,), jnp.float32),
        "g1": 1.0 + 0.1 * jax.random.normal(ks[2], (cout,), jnp.float32),
        "bt1": 0.1 * jax.random.normal(ks[3], (cout,), jnp.float32),
        "m1": 0.1 * jax.random.normal(ks[4], (cout,), jnp.float32),
        "v1": 1.0 + 0.1 * jnp.abs(jax.random.normal(ks[5], (cout,), jnp.float32)),
        "w2": 0.1 * jax.random.normal(ks[6], (3, 3, cout, cout), jnp.float32),
        "cb2": 0.1 * jax.random.normal(ks[7], (cout,), jnp.float32),
        "g2": 1.0 + 0.1 * jax.random.normal(ks[8], (cout,), jnp.float32),
        "bt2": 0.1 * jax.random.normal(ks[9], (cout,), jnp.float32),
        "m2": 0.1 * jax.random.normal(ks[10], (cout,), jnp.float32),
        "v2": 1.0 + 0.1 * jnp.abs(jax.random.normal(ks[11], (cout,), jnp.float32)),
    }


def reference(x_nchw, p):
    """Pure-JAX reference matching PyTorch ConvBlock in eval mode."""
    x = jnp.transpose(x_nchw, (0, 2, 3, 1))

    def conv(x, w, b):
        y = lax.conv_general_dilated(
            x, w, window_strides=(1, 1), padding="SAME",
            dimension_numbers=("NHWC", "HWIO", "NHWC"))
        return y + b

    def bn(x, g, b, m, v):
        return (x - m) / jnp.sqrt(v + BN_EPS) * g + b

    def lrelu(x):
        return jnp.where(x >= 0, x, NEG_SLOPE * x)

    y = lrelu(bn(conv(x, p["w1"], p["cb1"]), p["g1"], p["bt1"], p["m1"], p["v1"]))
    y = lrelu(bn(conv(y, p["w2"], p["cb2"]), p["g2"], p["bt2"], p["m2"], p["v2"]))
    return jnp.transpose(y, (0, 3, 1, 2))


if __name__ == "__main__":
    N, Cin, Cout, H, W = 2, 4, 8, 16, 16
    key = jax.random.PRNGKey(0)
    kx, kp = jax.random.split(key)
    x = jax.random.normal(kx, (N, Cin, H, W), jnp.float32)
    p = make_params(kp, Cin, Cout)

    # Banded weights + BN folding built once (weights are static in eval mode).
    params = prepare_conv_block_params(p, W)

    out = conv_block_pallas(x, params)
    out = jax.block_until_ready(out)

    ref = reference(x, p)
    assert out.shape == (N, Cout, H, W)
    max_err = float(jnp.max(jnp.abs(out - ref)))
    # bf16 matmul operands -> slightly looser tolerance than pure f32.
    assert jnp.allclose(out, ref, atol=5e-2, rtol=5e-2), max_err
    print("KERNEL_OK")
</pallas_src>

<mosaic_0001>
module attributes {stable_mosaic.version = 11 : i64} {
  func.func @_conv_block_kernel(%arg0: i32, %arg1: memref<32x64xbf16, #tpu.memory_space<vmem>>, %arg2: memref<64x384xbf16, #tpu.memory_space<vmem>>, %arg3: memref<1x128xf32, #tpu.memory_space<vmem>>, %arg4: memref<128x384xbf16, #tpu.memory_space<vmem>>, %arg5: memref<1x128xf32, #tpu.memory_space<vmem>>, %arg6: memref<32x128xf32, #tpu.memory_space<vmem>>, %arg7: memref<32x128xf32, #tpu.memory_space<vmem>>) attributes {dimension_semantics = [#tpu.dimension_semantics<parallel>], iteration_bounds = array<i64: 1>, scalar_prefetch = 0 : i64, scratch_operands = 1 : i64, tpu.core_type = #tpu.core_type<tc>, window_params = [{transform_indices = @transform_0, window_bounds = array<i64: 32, 64>}, {pipeline_mode = #tpu.pipeline_mode<synchronous>, transform_indices = @transform_1, window_bounds = array<i64: 64, 384>}, {pipeline_mode = #tpu.pipeline_mode<synchronous>, transform_indices = @transform_2, window_bounds = array<i64: 1, 128>}, {pipeline_mode = #tpu.pipeline_mode<synchronous>, transform_indices = @transform_3, window_bounds = array<i64: 128, 384>}, {pipeline_mode = #tpu.pipeline_mode<synchronous>, transform_indices = @transform_4, window_bounds = array<i64: 1, 128>}, {transform_indices = @transform_5, window_bounds = array<i64: 32, 128>}]} {
    %0 = tpu.iota {dimensions = array<i32: 0>} : vector<32x128xi32>
    %c16_i32 = arith.constant 16 : i32
    %c0_i32 = arith.constant 0 : i32
    %1 = arith.cmpi eq, %c16_i32, %c0_i32 : i32
    %c1_i32 = arith.constant 1 : i32
    %2 = arith.select %1, %c1_i32, %c16_i32 : i32
    %3 = vector.broadcast %2 : i32 to vector<32x128xi32>
    %4 = arith.remsi %0, %3 : vector<32x128xi32>
    %c0_i32_0 = arith.constant 0 : i32
    %5 = vector.broadcast %c0_i32_0 : i32 to vector<32x128xi32>
    %6 = arith.cmpi ne, %4, %5 : vector<32x128xi32>
    %c0_i32_1 = arith.constant 0 : i32
    %7 = vector.broadcast %c0_i32_1 : i32 to vector<32x128xi32>
    %8 = arith.cmpi slt, %4, %7 : vector<32x128xi32>
    %c0_i32_2 = arith.constant 0 : i32
    %9 = arith.cmpi slt, %2, %c0_i32_2 : i32
    %10 = vector.broadcast %9 : i1 to vector<32x128xi1>
    %11 = vector.broadcast %10 : vector<32x128xi1> to vector<32x128xi1>
    %12 = arith.xori %8, %11 : vector<32x128xi1>
    %13 = arith.andi %12, %6 : vector<32x128xi1>
    %14 = vector.broadcast %2 : i32 to vector<32x128xi32>
    %15 = arith.addi %4, %14 : vector<32x128xi32>
    %16 = arith.select %13, %15, %4 : vector<32x128xi1>, vector<32x128xi32>
    %c0_i32_3 = arith.constant 0 : i32
    %17 = vector.broadcast %c0_i32_3 : i32 to vector<32x128xi32>
    %18 = arith.cmpi ne, %16, %17 : vector<32x128xi32>
    %c16_i32_4 = arith.constant 16 : i32
    %c0_i32_5 = arith.constant 0 : i32
    %19 = arith.cmpi eq, %c16_i32_4, %c0_i32_5 : i32
    %c1_i32_6 = arith.constant 1 : i32
    %20 = arith.select %19, %c1_i32_6, %c16_i32_4 : i32
    %21 = vector.broadcast %20 : i32 to vector<32x128xi32>
    %22 = arith.remsi %0, %21 : vector<32x128xi32>
    %c0_i32_7 = arith.constant 0 : i32
    %23 = vector.broadcast %c0_i32_7 : i32 to vector<32x128xi32>
    %24 = arith.cmpi ne, %22, %23 : vector<32x128xi32>
    %c0_i32_8 = arith.constant 0 : i32
    %25 = vector.broadcast %c0_i32_8 : i32 to vector<32x128xi32>
    %26 = arith.cmpi slt, %22, %25 : vector<32x128xi32>
    %c0_i32_9 = arith.constant 0 : i32
    %27 = arith.cmpi slt, %20, %c0_i32_9 : i32
    %28 = vector.broadcast %27 : i1 to vector<32x128xi1>
    %29 = vector.broadcast %28 : vector<32x128xi1> to vector<32x128xi1>
    %30 = arith.xori %26, %29 : vector<32x128xi1>
    %31 = arith.andi %30, %24 : vector<32x128xi1>
    %32 = vector.broadcast %20 : i32 to vector<32x128xi32>
    %33 = arith.addi %22, %32 : vector<32x128xi32>
    %34 = arith.select %31, %33, %22 : vector<32x128xi1>, vector<32x128xi32>
    %c15_i32 = arith.constant 15 : i32
    %35 = vector.broadcast %c15_i32 : i32 to vector<32x128xi32>
    %36 = arith.cmpi ne, %34, %35 : vector<32x128xi32>
    %cst = arith.constant 0.000000e+00 : f32
    %37 = vector.broadcast %cst : f32 to vector<1x128xf32>
    %c0 = arith.constant 0 : index
    %c0_10 = arith.constant 0 : index
    %38 = vector.load %arg1[%c0, %c0_10] : memref<32x64xbf16, #tpu.memory_space<vmem>>, vector<32x64xbf16>
    %c0_11 = arith.constant 0 : index
    %c0_12 = arith.constant 0 : index
    %39 = vector.load %arg2[%c0_11, %c0_12] : memref<64x384xbf16, #tpu.memory_space<vmem>>, vector<64x384xbf16>
    %cst_13 = arith.constant dense<0.000000e+00> : vector<32x384xf32>
    %40 = tpu.matmul %38, %39, %cst_13 {dimension_numbers = #tpu.dot_dimension_numbers<[1], [0], [0], [1], [0, 0, 1, 1], [], []>} : vector<32x64xbf16>, vector<64x384xbf16>, vector<32x384xf32> -> vector<32x384xf32>
    %41 = vector.extract_strided_slice %40 {offsets = [0, 0], sizes = [32, 128], strides = [1, 1]} : vector<32x384xf32> to vector<32x128xf32>
    %42 = vector.extract_strided_slice %40 {offsets = [0, 128], sizes = [32, 128], strides = [1, 1]} : vector<32x384xf32> to vector<32x128xf32>
    %43 = vector.extract_strided_slice %40 {offsets = [0, 256], sizes = [32, 128], strides = [1, 1]} : vector<32x384xf32> to vector<32x128xf32>
    %c0_14 = arith.constant 0 : index
    %c0_15 = arith.constant 0 : index
    %44 = vector.load %arg7[%c0_14, %c0_15] : memref<32x128xf32, #tpu.memory_space<vmem>>, vector<1x128xf32>
    tpu.vector_store %arg7[%c0_14, %c0_15], %37 {strides = array<i32>} : memref<32x128xf32, #tpu.memory_space<vmem>>, vector<1x128xf32>,
    %45 = vector.extract_strided_slice %41 {offsets = [0, 0], sizes = [31, 128], strides = [1, 1]} : vector<32x128xf32> to vector<31x128xf32>
    %c1 = arith.constant 1 : index
    %c0_16 = arith.constant 0 : index
    %46 = vector.load %arg7[%c1, %c0_16] : memref<32x128xf32, #tpu.memory_space<vmem>>, vector<31x128xf32>
    tpu.vector_store %arg7[%c1, %c0_16], %45 {strides = array<i32>} : memref<32x128xf32, #tpu.memory_space<vmem>>, vector<31x128xf32>,
    %c0_17 = arith.constant 0 : index
    %c0_18 = arith.constant 0 : index
    %47 = vector.load %arg7[%c0_17, %c0_18] : memref<32x128xf32, #tpu.memory_space<vmem>>, vector<32x128xf32>
    %cst_19 = arith.constant 0.000000e+00 : f32
    %48 = vector.broadcast %cst_19 : f32 to vector<32x128xf32>
    %49 = arith.select %18, %47, %48 : vector<32x128xi1>, vector<32x128xf32>
    %50 = arith.addf %42, %49 : vector<32x128xf32>
    %c31 = arith.constant 31 : index
    %c0_20 = arith.constant 0 : index
    %51 = vector.load %arg7[%c31, %c0_20] : memref<32x128xf32, #tpu.memory_space<vmem>>, vector<1x128xf32>
    tpu.vector_store %arg7[%c31, %c0_20], %37 {strides = array<i32>} : memref<32x128xf32, #tpu.memory_space<vmem>>, vector<1x128xf32>,
    %52 = vector.extract_strided_slice %43 {offsets = [1, 0], sizes = [31, 128], strides = [1, 1]} : vector<32x128xf32> to vector<31x128xf32>
    %c0_21 = arith.constant 0 : index
    %c0_22 = arith.constant 0 : index
    %53 = vector.load %arg7[%c0_21, %c0_22] : memref<32x128xf32, #tpu.memory_space<vmem>>, vector<31x128xf32>
    tpu.vector_store %arg7[%c0_21, %c0_22], %52 {strides = array<i32>} : memref<32x128xf32, #tpu.memory_space<vmem>>, vector<31x128xf32>,
    %c0_23 = arith.constant 0 : index
    %c0_24 = arith.constant 0 : index
    %54 = vector.load %arg7[%c0_23, %c0_24] : memref<32x128xf32, #tpu.memory_space<vmem>>, vector<32x128xf32>
    %cst_25 = arith.constant 0.000000e+00 : f32
    %55 = vector.broadcast %cst_25 : f32 to vector<32x128xf32>
    %56 = arith.select %36, %54, %55 : vector<32x128xi1>, vector<32x128xf32>
    %57 = arith.addf %50, %56 : vector<32x128xf32>
    %c0_26 = arith.constant 0 : index
    %c0_27 = arith.constant 0 : index
    %58 = vector.load %arg3[%c0_26, %c0_27] : memref<1x128xf32, #tpu.memory_space<vmem>>, vector<1x128xf32>
    %59 = vector.broadcast %58 : vector<1x128xf32> to vector<32x128xf32>
    %60 = arith.addf %57, %59 : vector<32x128xf32>
    %cst_28 = arith.constant 0.000000e+00 : f32
    %61 = vector.broadcast %cst_28 : f32 to vector<32x128xf32>
    %62 = arith.cmpf oge, %60, %61 : vector<32x128xf32>
    %cst_29 = arith.constant 0.00999999977 : f32
    %63 = vector.broadcast %cst_29 : f32 to vector<32x128xf32>
    %64 = arith.mulf %63, %60 : vector<32x128xf32>
    %65 = arith.select %62, %60, %64 : vector<32x128xi1>, vector<32x128xf32>
    %66 = arith.truncf %65 : vector<32x128xf32> to vector<32x128xbf16>
    %c0_30 = arith.constant 0 : index
    %c0_31 = arith.constant 0 : index
    %67 = vector.load %arg4[%c0_30, %c0_31] : memref<128x384xbf16, #tpu.memory_space<vmem>>, vector<128x384xbf16>
    %cst_32 = arith.constant dense<0.000000e+00> : vector<32x384xf32>
    %68 = tpu.matmul %66, %67, %cst_32 {dimension_numbers = #tpu.dot_dimension_numbers<[1], [0], [0], [1], [0, 0, 1, 1], [], []>} : vector<32x128xbf16>, vector<128x384xbf16>, vector<32x384xf32> -> vector<32x384xf32>
    %69 = vector.extract_strided_slice %68 {offsets = [0, 0], sizes = [32, 128], strides = [1, 1]} : vector<32x384xf32> to vector<32x128xf32>
    %70 = vector.extract_strided_slice %68 {offsets = [0, 128], sizes = [32, 128], strides = [1, 1]} : vector<32x384xf32> to vector<32x128xf32>
    %71 = vector.extract_strided_slice %68 {offsets = [0, 256], sizes = [32, 128], strides = [1, 1]} : vector<32x384xf32> to vector<32x128xf32>
    %c0_33 = arith.constant 0 : index
    %c0_34 = arith.constant 0 : index
    %72 = vector.load %arg7[%c0_33, %c0_34] : memref<32x128xf32, #tpu.memory_space<vmem>>, vector<1x128xf32>
    tpu.vector_store %arg7[%c0_33, %c0_34], %37 {strides = array<i32>} : memref<32x128xf32, #tpu.memory_space<vmem>>, vector<1x128xf32>,
    %73 = vector.extract_strided_slice %69 {offsets = [0, 0], sizes = [31, 128], strides = [1, 1]} : vector<32x128xf32> to vector<31x128xf32>
    %c1_35 = arith.constant 1 : index
    %c0_36 = arith.constant 0 : index
    %74 = vector.load %arg7[%c1_35, %c0_36] : memref<32x128xf32, #tpu.memory_space<vmem>>, vector<31x128xf32>
    tpu.vector_store %arg7[%c1_35, %c0_36], %73 {strides = array<i32>} : memref<32x128xf32, #tpu.memory_space<vmem>>, vector<31x128xf32>,
    %c0_37 = arith.constant 0 : index
    %c0_38 = arith.constant 0 : index
    %75 = vector.load %arg7[%c0_37, %c0_38] : memref<32x128xf32, #tpu.memory_space<vmem>>, vector<32x128xf32>
    %cst_39 = arith.constant 0.000000e+00 : f32
    %76 = vector.broadcast %cst_39 : f32 to vector<32x128xf32>
    %77 = arith.select %18, %75, %76 : vector<32x128xi1>, vector<32x128xf32>
    %78 = arith.addf %70, %77 : vector<32x128xf32>
    %c31_40 = arith.constant 31 : index
    %c0_41 = arith.constant 0 : index
    %79 = vector.load %arg7[%c31_40, %c0_41] : memref<32x128xf32, #tpu.memory_space<vmem>>, vector<1x128xf32>
    tpu.vector_store %arg7[%c31_40, %c0_41], %37 {strides = array<i32>} : memref<32x128xf32, #tpu.memory_space<vmem>>, vector<1x128xf32>,
    %80 = vector.extract_strided_slice %71 {offsets = [1, 0], sizes = [31, 128], strides = [1, 1]} : vector<32x128xf32> to vector<31x128xf32>
    %c0_42 = arith.constant 0 : index
    %c0_43 = arith.constant 0 : index
    %81 = vector.load %arg7[%c0_42, %c0_43] : memref<32x128xf32, #tpu.memory_space<vmem>>, vector<31x128xf32>
    tpu.vector_store %arg7[%c0_42, %c0_43], %80 {strides = array<i32>} : memref<32x128xf32, #tpu.memory_space<vmem>>, vector<31x128xf32>,
    %c0_44 = arith.constant 0 : index
    %c0_45 = arith.constant 0 : index
    %82 = vector.load %arg7[%c0_44, %c0_45] : memref<32x128xf32, #tpu.memory_space<vmem>>, vector<32x128xf32>
    %cst_46 = arith.constant 0.000000e+00 : f32
    %83 = vector.broadcast %cst_46 : f32 to vector<32x128xf32>
    %84 = arith.select %36, %82, %83 : vector<32x128xi1>, vector<32x128xf32>
    %85 = arith.addf %78, %84 : vector<32x128xf32>
    %c0_47 = arith.constant 0 : index
    %c0_48 = arith.constant 0 : index
    %86 = vector.load %arg5[%c0_47, %c0_48] : memref<1x128xf32, #tpu.memory_space<vmem>>, vector<1x128xf32>
    %87 = vector.broadcast %86 : vector<1x128xf32> to vector<32x128xf32>
    %88 = arith.addf %85, %87 : vector<32x128xf32>
    %cst_49 = arith.constant 0.000000e+00 : f32
    %89 = vector.broadcast %cst_49 : f32 to vector<32x128xf32>
    %90 = arith.cmpf oge, %88, %89 : vector<32x128xf32>
    %cst_50 = arith.constant 0.00999999977 : f32
    %91 = vector.broadcast %cst_50 : f32 to vector<32x128xf32>
    %92 = arith.mulf %91, %88 : vector<32x128xf32>
    %93 = arith.select %90, %88, %92 : vector<32x128xi1>, vector<32x128xf32>
    %c0_51 = arith.constant 0 : index
    %c0_52 = arith.constant 0 : index
    %94 = vector.load %arg6[%c0_51, %c0_52] : memref<32x128xf32, #tpu.memory_space<vmem>>, vector<32x128xf32>
    tpu.vector_store %arg6[%c0_51, %c0_52], %93 {strides = array<i32>} : memref<32x128xf32, #tpu.memory_space<vmem>>, vector<32x128xf32>,
    return
  }
  func.func @transform_0(%arg0: i32) -> (i32, i32) {
    %c0_i32 = arith.constant 0 : i32
    %c0_i32_0 = arith.constant 0 : i32
    return %arg0, %c0_i32 : i32, i32
  }
  func.func @transform_1(%arg0: i32) -> (i32, i32) {
    %c0_i32 = arith.constant 0 : i32
    %c0_i32_0 = arith.constant 0 : i32
    %c0_i32_1 = arith.constant 0 : i32
    return %c0_i32, %c0_i32_0 : i32, i32
  }
  func.func @transform_2(%arg0: i32) -> (i32, i32) {
    %c0_i32 = arith.constant 0 : i32
    %c0_i32_0 = arith.constant 0 : i32
    %c0_i32_1 = arith.constant 0 : i32
    return %c0_i32, %c0_i32_0 : i32, i32
  }
  func.func @transform_3(%arg0: i32) -> (i32, i32) {
    %c0_i32 = arith.constant 0 : i32
    %c0_i32_0 = arith.constant 0 : i32
    %c0_i32_1 = arith.constant 0 : i32
    return %c0_i32, %c0_i32_0 : i32, i32
  }
  func.func @transform_4(%arg0: i32) -> (i32, i32) {
    %c0_i32 = arith.constant 0 : i32
    %c0_i32_0 = arith.constant 0 : i32
    %c0_i32_1 = arith.constant 0 : i32
    return %c0_i32, %c0_i32_0 : i32, i32
  }
  func.func @transform_5(%arg0: i32) -> (i32, i32) {
    %c0_i32 = arith.constant 0 : i32
    %c0_i32_0 = arith.constant 0 : i32
    return %arg0, %c0_i32 : i32, i32
  }
}

</mosaic_0001>

<llo_original>
// kernel: tpu_custom_call.1
$region0: #{tpu_custom_call.1}
  #allocation0 [shape = 'u32[]', space=smem, size = 0x4, offset = 0x4, fixed_abs, tag = 'smem constant byte address 0x4 - core index']
  #allocation1 [shape = 'u32[144,128]{1,0:T(1,128)}', space=vmem, size = 0x12000, scoped, tag = 'internal scratch']
  #allocation2 [shape = 'f32[32,128]{1,0:T(8,128)}', space=vmem, size = 0x4000, scoped, tag = 'scratch operand']
  %s0 = inlined_call_operand.hbm [shape: bf16[32,64], index: 0, kind: input, shape index: {}]
  %s1 = inlined_call_operand.hbm [shape: bf16[64,384], index: 1, kind: input, shape index: {}]
  %s2 = inlined_call_operand.vmem [shape: f32[1,128], index: 2, kind: input, shape index: {}]
  %s3 = inlined_call_operand.hbm [shape: bf16[128,384], index: 3, kind: input, shape index: {}]
  %s4 = inlined_call_operand.vmem [shape: f32[1,128], index: 4, kind: input, shape index: {}]
  %s5 = inlined_call_operand.hbm [shape: f32[32,128], index: 5, kind: output, shape index: {}]
  %s6 = sld [smem:[#allocation0]]
  $region42: #{tpu_custom_call.1} parent=0
    _
  %s8 = ssub.s32 1, %s6
  %s9 = scalar_select 0, %s8, %s6
  $region1: #{tpu_custom_call.1} parent=0
    #allocation3 [shape = 'u8[8192]{0}', space=vmem, size = 0x2000, scoped, tag = 'input window, operand 0, single buffered']
    #allocation4 [shape = 's32[1]{0}', space=sflag, size = 0x4, scoped, tag = 'scoped memory for tpu_custom_call.1']
    #allocation5 [shape = 's32[1]{0}', space=sflag, size = 0x4, scoped, tag = 'scoped memory for tpu_custom_call.1']
    #allocation6 [shape = 'u8[49152]{0}', space=vmem, size = 0xc000, scoped, tag = 'input window, operand 1, single buffered']
    #allocation7 [shape = 's32[1]{0}', space=sflag, size = 0x4, scoped, tag = 'scoped memory for tpu_custom_call.1']
    #allocation8 [shape = 'u8[98304]{0}', space=vmem, size = 0x18000, scoped, tag = 'input window, operand 3, single buffered']
    #allocation9 [shape = 'u8[16384]{0}', space=vmem, size = 0x4000, scoped, tag = 'output window, operand 0, single buffered']
    %10 = vsyncpa [#allocation4], 0
    %11 = vsyncpa [#allocation7], 0
    %12 = vsyncpa [#allocation5], 0
    // Predicated region
    $region2: #{tpu_custom_call.1} parent=1 // pred_check
      _
    $region3: #{tpu_custom_call.1} parent=1 // pred_check_branch
      %14 = sbr.rel (0) target = $region5
    $region4: #{tpu_custom_call.1} parent=1 // pred_region
      %s16 = ssub.s32 256, 256
      %17 = vsyncadd [#allocation4], %s16
      %s18 = sshll.u32 [#allocation3], 4
      %s19 = int_to_ptr.vmem [resolvable:$true] %s18
      %24 = dma.hbm_to_vmem [thread:$0]  %s0, 256, %s19, [#allocation4], 64, 64, 4
    $region5: #{tpu_custom_call.1} parent=1 // pred_fallthru
      _
    // Predicated region
    $region6: #{tpu_custom_call.1} parent=1 // pred_check
      _
    $region7: #{tpu_custom_call.1} parent=1 // pred_check_branch
      %26 = sbr.rel (0) target = $region9
    $region8: #{tpu_custom_call.1} parent=1 // pred_region
      %s28 = ssub.s32 1536, 1536
      %29 = vsyncadd [#allocation7], %s28
      %s30 = sshll.u32 [#allocation6], 4
      %s31 = int_to_ptr.vmem [resolvable:$true] %s30
      %36 = dma.hbm_to_vmem [thread:$0]  %s1, 1536, %s31, [#allocation7], 192, 192, 12
    $region9: #{tpu_custom_call.1} parent=1 // pred_fallthru
      _
    // Predicated region
    $region10: #{tpu_custom_call.1} parent=1 // pred_check
      _
    $region11: #{tpu_custom_call.1} parent=1 // pred_check_branch
      %38 = sbr.rel (0) target = $region13
    $region12: #{tpu_custom_call.1} parent=1 // pred_region
      _
    $region13: #{tpu_custom_call.1} parent=1 // pred_fallthru
      _
    // Predicated region
    $region14: #{tpu_custom_call.1} parent=1 // pred_check
      _
    $region15: #{tpu_custom_call.1} parent=1 // pred_check_branch
      %40 = sbr.rel (0) target = $region17
    $region16: #{tpu_custom_call.1} parent=1 // pred_region
      %s42 = ssub.s32 3072, 3072
      %43 = vsyncadd [#allocation7], %s42
      %s44 = sshll.u32 [#allocation8], 4
      %s45 = int_to_ptr.vmem [resolvable:$true] %s44
      %50 = dma.hbm_to_vmem [thread:$0]  %s3, 3072, %s45, [#allocation7], 192, 192, 12
    $region17: #{tpu_custom_call.1} parent=1 // pred_fallthru
      _
    // Predicated region
    $region18: #{tpu_custom_call.1} parent=1 // pred_check
      _
    $region19: #{tpu_custom_call.1} parent=1 // pred_check_branch
      %52 = sbr.rel (0) target = $region21
    $region20: #{tpu_custom_call.1} parent=1 // pred_region
      _
    $region21: #{tpu_custom_call.1} parent=1 // pred_fallthru
      _
    // Predicated region
    $region22: #{tpu_custom_call.1} parent=1 // pred_check
      _
    $region23: #{tpu_custom_call.1} parent=1 // pred_check_branch
      %54 = sbr.rel (0) target = $region25
    $region24: #{tpu_custom_call.1} parent=1 // pred_region
      %55 = dma.done [#allocation4], 256
    $region25: #{tpu_custom_call.1} parent=1 // pred_fallthru
      _
    // Predicated region
    $region26: #{tpu_custom_call.1} parent=1 // pred_check
      _
    $region27: #{tpu_custom_call.1} parent=1 // pred_check_branch
      %57 = sbr.rel (0) target = $region29
    $region28: #{tpu_custom_call.1} parent=1 // pred_region
      %58 = dma.done [#allocation7], 1536
    $region29: #{tpu_custom_call.1} parent=1 // pred_fallthru
      _
    // Predicated region
    $region30: #{tpu_custom_call.1} parent=1 // pred_check
      _
    $region31: #{tpu_custom_call.1} parent=1 // pred_check_branch
      %60 = sbr.rel (0) target = $region33
    $region32: #{tpu_custom_call.1} parent=1 // pred_region
      %61 = dma.done [#allocation7], 3072
    $region33: #{tpu_custom_call.1} parent=1 // pred_fallthru
      _
    %v63 = vlaneseq
    %v64 = vshrl.u32 %v63, 7
    %v65 = vadd.s32 %v64, 8
    %v66 = vadd.s32 %v64, 16
    %v67 = vadd.s32 %v64, 24
    %vm68 = vcmp.lt.s32.totalorder %v64, 0
    %v69 = vsub.s32 0, %v64
    %v70 = vsel %vm68, %v69, %v64
    %v71 = vshrl.u32 %v70, 4
    %v72 = vand.u32 %v70, 15
    %v73 = vsub.s32 0, %v72
    %v74 = vsel %vm68, %v73, %v72
    %vm75 = vcmp.lt.s32.totalorder %v65, 0
    %v76 = vsub.s32 0, %v65
    %v77 = vsel %vm75, %v76, %v65
    %v78 = vshrl.u32 %v77, 4
    %v79 = vand.u32 %v77, 15
    %v80 = vsub.s32 0, %v79
    %v81 = vsel %vm75, %v80, %v79
    %vm82 = vcmp.lt.s32.totalorder %v66, 0
    %v83 = vsub.s32 0, %v66
    %v84 = vsel %vm82, %v83, %v66
    %v85 = vshrl.u32 %v84, 4
    %v86 = vand.u32 %v84, 15
    %v87 = vsub.s32 0, %v86
    %v88 = vsel %vm82, %v87, %v86
    %vm89 = vcmp.lt.s32.totalorder %v67, 0
    %v90 = vsub.s32 0, %v67
    %v91 = vsel %vm89, %v90, %v67
    %v92 = vshrl.u32 %v91, 4
    %v93 = vand.u32 %v91, 15
    %v94 = vsub.s32 0, %v93
    %v95 = vsel %vm89, %v94, %v93
    %vm96 = vcmp.ne.s32.totalorder %v74, 0
    %vm97 = vcmp.ne.s32.totalorder %v81, 0
    %vm98 = vcmp.ne.s32.totalorder %v88, 0
    %vm99 = vcmp.ne.s32.totalorder %v95, 0
    %vm100 = vcmp.lt.s32.totalorder %v74, 0
    %vm101 = vcmp.lt.s32.totalorder %v81, 0
    %vm102 = vcmp.lt.s32.totalorder %v88, 0
    %vm103 = vcmp.lt.s32.totalorder %v95, 0
    %vm104 = vmand %vm100, %vm96
    %vm105 = vmand %vm101, %vm97
    %vm106 = vmand %vm102, %vm98
    %vm107 = vmand %vm103, %vm99
    %v108 = vadd.s32 %v74, 16
    %v109 = vadd.s32 %v81, 16
    %v110 = vadd.s32 %v88, 16
    %v111 = vadd.s32 %v95, 16
    %v112 = vsel %vm104, %v108, %v74
    %v113 = vsel %vm105, %v109, %v81
    %v114 = vsel %vm106, %v110, %v88
    %v115 = vsel %vm107, %v111, %v95
    %vm116 = vcmp.ne.s32.totalorder %v112, 0
    %vm117 = vcmp.ne.s32.totalorder %v113, 0
    %vm118 = vcmp.ne.s32.totalorder %v114, 0
    %vm119 = vcmp.ne.s32.totalorder %v115, 0
    %vm120 = vcmp.ne.s32.totalorder %v112, 15
    %vm121 = vcmp.ne.s32.totalorder %v113, 15
    %vm122 = vcmp.ne.s32.totalorder %v114, 15
    %vm123 = vcmp.ne.s32.totalorder %v115, 15
    %v124 = vld [vmem:[#allocation3] sm:$0xf]
    %v125 = vld [vmem:[#allocation3 + $0x4] sm:$0xf]
    %v126 = vld [vmem:[#allocation3 + $0x8] sm:$0xf]
    %v127 = vld [vmem:[#allocation3 + $0xc] sm:$0xf]
    %v128 = vld [vmem:[#allocation6] sm:$0xff]
    %v129 = vld [vmem:[#allocation6 + $0x8] sm:$0xf]
    %v130 = vld [vmem:[#allocation6 + $0xc] sm:$0xff]
    %v131 = vld [vmem:[#allocation6 + $0x14] sm:$0xf]
    %v132 = vld [vmem:[#allocation6 + $0x18] sm:$0xff]
    %v133 = vld [vmem:[#allocation6 + $0x20] sm:$0xf]
    %v134 = vld [vmem:[#allocation6 + $0x24] sm:$0xff]
    %v135 = vld [vmem:[#allocation6 + $0x2c] sm:$0xf]
    %v136 = vld [vmem:[#allocation6 + $0x30] sm:$0xff]
    %v137 = vld [vmem:[#allocation6 + $0x38] sm:$0xf]
    %v138 = vld [vmem:[#allocation6 + $0x3c] sm:$0xff]
    %v139 = vld [vmem:[#allocation6 + $0x44] sm:$0xf]
    %v140 = vld [vmem:[#allocation6 + $0x48] sm:$0xff]
    %v141 = vld [vmem:[#allocation6 + $0x50] sm:$0xf]
    %v142 = vld [vmem:[#allocation6 + $0x54] sm:$0xff]
    %v143 = vld [vmem:[#allocation6 + $0x5c] sm:$0xf]
    %v148 = vunpack.c.l.b16 %v124
    %v149 = vunpack.c.l.b16 %v125
    %v150 = vunpack.c.l.b16 %v126
    %v151 = vunpack.c.l.b16 %v127
    %v152 = vpack.c.b16 %v149, %v148
    %v153 = vpack.c.b16 %v151, %v150
    %v170 = vunpack.c.l.b16 %v128
    %v171 = vunpack.c.h.b16 %v128
    %v172 = vunpack.c.l.b16 %v129
    %v173 = vunpack.c.l.b16 %v130
    %v174 = vunpack.c.h.b16 %v130
    %v175 = vunpack.c.l.b16 %v131
    %v176 = vunpack.c.l.b16 %v132
    %v177 = vunpack.c.h.b16 %v132
    %v178 = vunpack.c.l.b16 %v133
    %v179 = vunpack.c.l.b16 %v134
    %v180 = vunpack.c.h.b16 %v134
    %v181 = vunpack.c.l.b16 %v135
    %v182 = vunpack.c.l.b16 %v136
    %v183 = vunpack.c.h.b16 %v136
    %v184 = vunpack.c.l.b16 %v137
    %v185 = vunpack.c.l.b16 %v138
    %v186 = vunpack.c.h.b16 %v138
    %v187 = vunpack.c.l.b16 %v139
    %v188 = vunpack.c.l.b16 %v140
    %v189 = vunpack.c.h.b16 %v140
    %v190 = vunpack.c.l.b16 %v141
    %v191 = vunpack.c.l.b16 %v142
    %v192 = vunpack.c.h.b16 %v142
    %v193 = vunpack.c.l.b16 %v143
    %v194 = vpack.c.b16 %v173, %v170
    %v195 = vpack.c.b16 %v174, %v171
    %v196 = vpack.c.b16 %v175, %v172
    %v197 = vpack.c.b16 %v179, %v176
    %v198 = vpack.c.b16 %v180, %v177
    %v199 = vpack.c.b16 %v181, %v178
    %v200 = vpack.c.b16 %v185, %v182
    %v201 = vpack.c.b16 %v186, %v183
    %v202 = vpack.c.b16 %v187, %v184
    %v203 = vpack.c.b16 %v191, %v188
    %v204 = vpack.c.b16 %v192, %v189
    %v205 = vpack.c.b16 %v193, %v190
    %vm218 = vcmask 523264
    %v220 = vsel %vm218, %v152, 0
    %v223 = vsel %vm218, %v153, 0
    %225 = vmatprep.subr.bf16.mxu0 0
    %226 = vmatpush1.bf16.msra.mxu0 0
    %227 = vmatprep.subr.bf16.mxu0 0
    %228 = vmatpush1.bf16.msra.mxu0 0
    %229 = vmatprep.subr.bf16.mxu0 0
    %230 = vmatpush1.bf16.msra.mxu0 0
    %231 = vmatprep.subr.bf16.mxu0 0
    %232 = vmatpush1.bf16.msra.mxu0 0
    %233 = vmatprep.subr.bf16.mxu0 %v204
    %234 = vmatpush1.bf16.msra.mxu0 %v203
    %235 = vmatprep.subr.bf16.mxu0 %v201
    %236 = vmatpush1.bf16.msra.mxu0 %v200
    %237 = vmatprep.subr.bf16.mxu0 %v198
    %238 = vmatpush1.bf16.msra.mxu0 %v197
    %239 = vmatprep.subr.bf16.mxu0 %v195
    %240 = vmatpush1.bf16.msra.mxu0 %v194
    %241 = vmatprep.subr.bf16.mxu0 0
    %242 = vmatpush2.bf16.msra.mxu0 0
    %243 = vmatprep.subr.bf16.mxu0 0
    %244 = vmatpush2.bf16.msra.mxu0 0
    %245 = vmatprep.subr.bf16.mxu0 0
    %246 = vmatpush2.bf16.msra.mxu0 0
    %247 = vmatprep.subr.bf16.mxu0 0
    %248 = vmatpush2.bf16.msra.mxu0 0
    %249 = vmatprep.subr.bf16.mxu0 0
    %250 = vmatpush2.bf16.msra.mxu0 0
    %251 = vmatprep.subr.bf16.mxu0 0
    %252 = vmatpush2.bf16.msra.mxu0 0
    %253 = vmatprep.subr.bf16.mxu0 0
    %254 = vmatpush2.bf16.msra.mxu0 0
    %255 = vmatprep.subr.bf16.mxu0 0
    %256 = vmatpush2.bf16.msra.mxu0 0
    %257 = vmatprep.mubr.bf16.mxu0 0
    %258 = vmatmul.mubr.bf16.gmra.mxu0 %v220
    %v259 = vpop.f32.mrf.mxu0
    %v260 = vadd.f32 0.0, %v259
    %v261 = vpop.f32.mrf.mxu0
    %v262 = vadd.f32 0.0, %v261
    %v263 = vpop.f32.mrf.mxu0
    %v264 = vadd.f32 0.0, %v263
    %v265 = vpop.f32.mrf.mxu0
    %v266 = vadd.f32 0.0, %v265
    %267 = vmatprep.mubr.bf16.mxu0 0
    %268 = vmatmul.mubr.bf16.gmra.mxu0 %v223
    %v269 = vpop.f32.mrf.mxu0
    %v270 = vadd.f32 0.0, %v269
    %v271 = vpop.f32.mrf.mxu0
    %v272 = vadd.f32 0.0, %v271
    %v273 = vpop.f32.mrf.mxu0
    %v274 = vadd.f32 0.0, %v273
    %v275 = vpop.f32.mrf.mxu0
    %v276 = vadd.f32 0.0, %v275
    %277 = vdwg.mxu0
    %278 = vmatprep.subr.bf16.mxu0 0
    %279 = vmatpush1.bf16.msra.mxu0 0
    %280 = vmatprep.subr.bf16.mxu0 0
    %281 = vmatpush1.bf16.msra.mxu0 0
    %282 = vmatprep.subr.bf16.mxu0 0
    %283 = vmatpush1.bf16.msra.mxu0 0
    %284 = vmatprep.subr.bf16.mxu0 0
    %285 = vmatpush1.bf16.msra.mxu0 0
    %286 = vmatprep.subr.bf16.mxu0 0
    %287 = vmatpush1.bf16.msra.mxu0 %v205
    %288 = vmatprep.subr.bf16.mxu0 0
    %289 = vmatpush1.bf16.msra.mxu0 %v202
    %290 = vmatprep.subr.bf16.mxu0 0
    %291 = vmatpush1.bf16.msra.mxu0 %v199
    %292 = vmatprep.subr.bf16.mxu0 0
    %293 = vmatpush1.bf16.msra.mxu0 %v196
    %294 = vmatprep.subr.bf16.mxu0 0
    %295 = vmatpush2.bf16.msra.mxu0 0
    %296 = vmatprep.subr.bf16.mxu0 0
    %297 = vmatpush2.bf16.msra.mxu0 0
    %298 = vmatprep.subr.bf16.mxu0 0
    %299 = vmatpush2.bf16.msra.mxu0 0
    %300 = vmatprep.subr.bf16.mxu0 0
    %301 = vmatpush2.bf16.msra.mxu0 0
    %302 = vmatprep.subr.bf16.mxu0 0
    %303 = vmatpush2.bf16.msra.mxu0 0
    %304 = vmatprep.subr.bf16.mxu0 0
    %305 = vmatpush2.bf16.msra.mxu0 0
    %306 = vmatprep.subr.bf16.mxu0 0
    %307 = vmatpush2.bf16.msra.mxu0 0
    %308 = vmatprep.subr.bf16.mxu0 0
    %309 = vmatpush2.bf16.msra.mxu0 0
    %310 = vmatprep.mubr.bf16.mxu0 0
    %311 = vmatmul.mubr.bf16.gmra.mxu0 %v220
    %v312 = vpop.f32.mrf.mxu0
    %v313 = vadd.f32 0.0, %v312
    %v314 = vpop.f32.mrf.mxu0
    %v315 = vpop.f32.mrf.mxu0
    %v316 = vadd.f32 0.0, %v315
    %v317 = vpop.f32.mrf.mxu0
    %318 = vmatprep.mubr.bf16.mxu0 0
    %319 = vmatmul.mubr.bf16.gmra.mxu0 %v223
    %v320 = vpop.f32.mrf.mxu0
    %v321 = vadd.f32 0.0, %v320
    %v322 = vpop.f32.mrf.mxu0
    %v323 = vpop.f32.mrf.mxu0
    %v324 = vadd.f32 0.0, %v323
    %v325 = vpop.f32.mrf.mxu0
    %326 = vdwg.mxu0
    %327 = vst [vmem:[#allocation2] sm:$0x1] 0.0
    %328 = vst [vmem:[#allocation2 + $0x1] sm:$0xff] %v260
    %329 = vst [vmem:[#allocation2 + $0x9] sm:$0xff] %v264
    %330 = vst [vmem:[#allocation2 + $0x11] sm:$0xff] %v270
    %331 = vst [vmem:[#allocation2 + $0x19] sm:$0x7f] %v274
    %v332 = vld [vmem:[#allocation2] sm:$0xff]
    %v333 = vld [vmem:[#allocation2 + $0x8] sm:$0xff]
    %v334 = vld [vmem:[#allocation2 + $0x10] sm:$0xff]
    %v335 = vld [vmem:[#allocation2 + $0x18] sm:$0xff]
    %v336 = vsel %vm116, %v332, 0.0
    %v337 = vsel %vm117, %v333, 0.0
    %v338 = vsel %vm118, %v334, 0.0
    %v339 = vsel %vm119, %v335, 0.0
    %v340 = vadd.f32 %v262, %v336
    %v341 = vadd.f32 %v266, %v337
    %v342 = vadd.f32 %v272, %v338
    %v343 = vadd.f32 %v276, %v339
    %344 = vst [vmem:[#allocation2 + $0x1f] sm:$0x1] 0.0
    %345 = vst [vmem:[#allocation2 - $0x1] sm:$0xfe] %v313
    %346 = vst [vmem:[#allocation2 + $0x7] sm:$0xff] %v316
    %347 = vst [vmem:[#allocation2 + $0xf] sm:$0xff] %v321
    %348 = vst [vmem:[#allocation2 + $0x17] sm:$0xff] %v324
    %v349 = vld [vmem:[#allocation2] sm:$0xff]
    %v350 = vld [vmem:[#allocation2 + $0x8] sm:$0xff]
    %v351 = vld [vmem:[#allocation2 + $0x10] sm:$0xff]
    %v352 = vld [vmem:[#allocation2 + $0x18] sm:$0xff]
    %v353 = vsel %vm120, %v349, 0.0
    %v354 = vsel %vm121, %v350, 0.0
    %v355 = vsel %vm122, %v351, 0.0
    %v356 = vsel %vm123, %v352, 0.0
    %v357 = vadd.f32 %v340, %v353
    %v358 = vadd.f32 %v341, %v354
    %v359 = vadd.f32 %v342, %v355
    %v360 = vadd.f32 %v343, %v356
    %v361 = vld [vmem:[%s2] sm:$0x1]
    %v363 = vlaneseq
    %v364 = vshrl.u32 %v363, 7
    %v365 = vsub.s32 0, %v364
    %v366 = vrot.slane %v361, %v365
    %v368 = vadd.f32 %v357, %v366
    %v369 = vadd.f32 %v358, %v366
    %v370 = vadd.f32 %v359, %v366
    %v371 = vadd.f32 %v360, %v366
    %vm372 = vcmp.ge.f32.partialorder %v368, 0.0
    %vm373 = vcmp.ge.f32.partialorder %v369, 0.0
    %vm374 = vcmp.ge.f32.partialorder %v370, 0.0
    %vm375 = vcmp.ge.f32.partialorder %v371, 0.0
    %v376 = vmul.f32 %v368, 0.01
    %v377 = vmul.f32 %v369, 0.01
    %v378 = vmul.f32 %v370, 0.01
    %v379 = vmul.f32 %v371, 0.01
    %v380 = vsel %vm372, %v368, %v376
    %v381 = vsel %vm373, %v369, %v377
    %v382 = vsel %vm374, %v370, %v378
    %v383 = vsel %vm375, %v371, %v379
    %v384 = vpack.c.bf16 %v381, %v380
    %v385 = vpack.c.bf16 %v383, %v382
    %v386 = vld [vmem:[#allocation8] sm:$0xff]
    %v387 = vld [vmem:[#allocation8 + $0x8] sm:$0xf]
    %v388 = vld [vmem:[#allocation8 + $0xc] sm:$0xff]
    %v389 = vld [vmem:[#allocation8 + $0x14] sm:$0xf]
    %v390 = vld [vmem:[#allocation8 + $0x18] sm:$0xff]
    %v391 = vld [vmem:[#allocation8 + $0x20] sm:$0xf]
    %v392 = vld [vmem:[#allocation8 + $0x24] sm:$0xff]
    %v393 = vld [vmem:[#allocation8 + $0x2c] sm:$0xf]
    %v394 = vld [vmem:[#allocation8 + $0x30] sm:$0xff]
    %v395 = vld [vmem:[#allocation8 + $0x38] sm:$0xf]
    %v396 = vld [vmem:[#allocation8 + $0x3c] sm:$0xff]
    %v397 = vld [vmem:[#allocation8 + $0x44] sm:$0xf]
    %v398 = vld [vmem:[#allocation8 + $0x48] sm:$0xff]
    %v399 = vld [vmem:[#allocation8 + $0x50] sm:$0xf]
    %v400 = vld [vmem:[#allocation8 + $0x54] sm:$0xff]
    %v401 = vld [vmem:[#allocation8 + $0x5c] sm:$0xf]
    %v402 = vld [vmem:[#allocation8 + $0x60] sm:$0xff]
    %v403 = vld [vmem:[#allocation8 + $0x68] sm:$0xf]
    %v404 = vld [vmem:[#allocation8 + $0x6c] sm:$0xff]
    %v405 = vld [vmem:[#allocation8 + $0x74] sm:$0xf]
    %v406 = vld [vmem:[#allocation8 + $0x78] sm:$0xff]
    %v407 = vld [vmem:[#allocation8 + $0x80] sm:$0xf]
    %v408 = vld [vmem:[#allocation8 + $0x84] sm:$0xff]
    %v409 = vld [vmem:[#allocation8 + $0x8c] sm:$0xf]
    %v410 = vld [vmem:[#allocation8 + $0x90] sm:$0xff]
    %v411 = vld [vmem:[#allocation8 + $0x98] sm:$0xf]
    %v412 = vld [vmem:[#allocation8 + $0x9c] sm:$0xff]
    %v413 = vld [vmem:[#allocation8 + $0xa4] sm:$0xf]
    %v414 = vld [vmem:[#allocation8 + $0xa8] sm:$0xff]
    %v415 = vld [vmem:[#allocation8 + $0xb0] sm:$0xf]
    %v416 = vld [vmem:[#allocation8 + $0xb4] sm:$0xff]
    %v417 = vld [vmem:[#allocation8 + $0xbc] sm:$0xf]
    %v450 = vunpack.c.l.b16 %v386
    %v451 = vunpack.c.h.b16 %v386
    %v452 = vunpack.c.l.b16 %v387
    %v453 = vunpack.c.l.b16 %v388
    %v454 = vunpack.c.h.b16 %v388
    %v455 = vunpack.c.l.b16 %v389
    %v456 = vunpack.c.l.b16 %v390
    %v457 = vunpack.c.h.b16 %v390
    %v458 = vunpack.c.l.b16 %v391
    %v459 = vunpack.c.l.b16 %v392
    %v460 = vunpack.c.h.b16 %v392
    %v461 = vunpack.c.l.b16 %v393
    %v462 = vunpack.c.l.b16 %v394
    %v463 = vunpack.c.h.b16 %v394
    %v464 = vunpack.c.l.b16 %v395
    %v465 = vunpack.c.l.b16 %v396
    %v466 = vunpack.c.h.b16 %v396
    %v467 = vunpack.c.l.b16 %v397
    %v468 = vunpack.c.l.b16 %v398
    %v469 = vunpack.c.h.b16 %v398
    %v470 = vunpack.c.l.b16 %v399
    %v471 = vunpack.c.l.b16 %v400
    %v472 = vunpack.c.h.b16 %v400
    %v473 = vunpack.c.l.b16 %v401
    %v474 = vunpack.c.l.b16 %v402
    %v475 = vunpack.c.h.b16 %v402
    %v476 = vunpack.c.l.b16 %v403
    %v477 = vunpack.c.l.b16 %v404
    %v478 = vunpack.c.h.b16 %v404
    %v479 = vunpack.c.l.b16 %v405
    %v480 = vunpack.c.l.b16 %v406
    %v481 = vunpack.c.h.b16 %v406
    %v482 = vunpack.c.l.b16 %v407
    %v483 = vunpack.c.l.b16 %v408
    %v484 = vunpack.c.h.b16 %v408
    %v485 = vunpack.c.l.b16 %v409
    %v486 = vunpack.c.l.b16 %v410
    %v487 = vunpack.c.h.b16 %v410
    %v488 = vunpack.c.l.b16 %v411
    %v489 = vunpack.c.l.b16 %v412
    %v490 = vunpack.c.h.b16 %v412
    %v491 = vunpack.c.l.b16 %v413
    %v492 = vunpack.c.l.b16 %v414
    %v493 = vunpack.c.h.b16 %v414
    %v494 = vunpack.c.l.b16 %v415
    %v495 = vunpack.c.l.b16 %v416
    %v496 = vunpack.c.h.b16 %v416
    %v497 = vunpack.c.l.b16 %v417
    %v498 = vpack.c.b16 %v453, %v450
    %v499 = vpack.c.b16 %v454, %v451
    %v500 = vpack.c.b16 %v455, %v452
    %v501 = vpack.c.b16 %v459, %v456
    %v502 = vpack.c.b16 %v460, %v457
    %v503 = vpack.c.b16 %v461, %v458
    %v504 = vpack.c.b16 %v465, %v462
    %v505 = vpack.c.b16 %v466, %v463
    %v506 = vpack.c.b16 %v467, %v464
    %v507 = vpack.c.b16 %v471, %v468
    %v508 = vpack.c.b16 %v472, %v469
    %v509 = vpack.c.b16 %v473, %v470
    %v510 = vpack.c.b16 %v477, %v474
    %v511 = vpack.c.b16 %v478, %v475
    %v512 = vpack.c.b16 %v479, %v476
    %v513 = vpack.c.b16 %v483, %v480
    %v514 = vpack.c.b16 %v484, %v481
    %v515 = vpack.c.b16 %v485, %v482
    %v516 = vpack.c.b16 %v489, %v486
    %v517 = vpack.c.b16 %v490, %v487
    %v518 = vpack.c.b16 %v491, %v488
    %v519 = vpack.c.b16 %v495, %v492
    %v520 = vpack.c.b16 %v496, %v493
    %v521 = vpack.c.b16 %v497, %v494
    %546 = vmatprep.subr.bf16.mxu0 %v520
    %547 = vmatpush1.bf16.msra.mxu0 %v519
    %548 = vmatprep.subr.bf16.mxu0 %v517
    %549 = vmatpush1.bf16.msra.mxu0 %v516
    %550 = vmatprep.subr.bf16.mxu0 %v514
    %551 = vmatpush1.bf16.msra.mxu0 %v513
    %552 = vmatprep.subr.bf16.mxu0 %v511
    %553 = vmatpush1.bf16.msra.mxu0 %v510
    %554 = vmatprep.subr.bf16.mxu0 %v508
    %555 = vmatpush1.bf16.msra.mxu0 %v507
    %556 = vmatprep.subr.bf16.mxu0 %v505
    %557 = vmatpush1.bf16.msra.mxu0 %v504
    %558 = vmatprep.subr.bf16.mxu0 %v502
    %559 = vmatpush1.bf16.msra.mxu0 %v501
    %560 = vmatprep.subr.bf16.mxu0 %v499
    %561 = vmatpush1.bf16.msra.mxu0 %v498
    %562 = vmatprep.subr.bf16.mxu0 0
    %563 = vmatpush2.bf16.msra.mxu0 0
    %564 = vmatprep.subr.bf16.mxu0 0
    %565 = vmatpush2.bf16.msra.mxu0 0
    %566 = vmatprep.subr.bf16.mxu0 0
    %567 = vmatpush2.bf16.msra.mxu0 0
    %568 = vmatprep.subr.bf16.mxu0 0
    %569 = vmatpush2.bf16.msra.mxu0 0
    %570 = vmatprep.subr.bf16.mxu0 0
    %571 = vmatpush2.bf16.msra.mxu0 0
    %572 = vmatprep.subr.bf16.mxu0 0
    %573 = vmatpush2.bf16.msra.mxu0 0
    %574 = vmatprep.subr.bf16.mxu0 0
    %575 = vmatpush2.bf16.msra.mxu0 0
    %576 = vmatprep.subr.bf16.mxu0 0
    %577 = vmatpush2.bf16.msra.mxu0 0
    %578 = vmatprep.mubr.bf16.mxu0 0
    %579 = vmatmul.mubr.bf16.gmra.mxu0 %v384
    %v580 = vpop.f32.mrf.mxu0
    %v581 = vadd.f32 0.0, %v580
    %v582 = vpop.f32.mrf.mxu0
    %v583 = vadd.f32 0.0, %v582
    %v584 = vpop.f32.mrf.mxu0
    %v585 = vadd.f32 0.0, %v584
    %v586 = vpop.f32.mrf.mxu0
    %v587 = vadd.f32 0.0, %v586
    %588 = vmatprep.mubr.bf16.mxu0 0
    %589 = vmatmul.mubr.bf16.gmra.mxu0 %v385
    %v590 = vpop.f32.mrf.mxu0
    %v591 = vadd.f32 0.0, %v590
    %v592 = vpop.f32.mrf.mxu0
    %v593 = vadd.f32 0.0, %v592
    %v594 = vpop.f32.mrf.mxu0
    %v595 = vadd.f32 0.0, %v594
    %v596 = vpop.f32.mrf.mxu0
    %v597 = vadd.f32 0.0, %v596
    %598 = vdwg.mxu0
    %599 = vmatprep.subr.bf16.mxu0 0
    %600 = vmatpush1.bf16.msra.mxu0 %v521
    %601 = vmatprep.subr.bf16.mxu0 0
    %602 = vmatpush1.bf16.msra.mxu0 %v518
    %603 = vmatprep.subr.bf16.mxu0 0
    %604 = vmatpush1.bf16.msra.mxu0 %v515
    %605 = vmatprep.subr.bf16.mxu0 0
    %606 = vmatpush1.bf16.msra.mxu0 %v512
    %607 = vmatprep.subr.bf16.mxu0 0
    %608 = vmatpush1.bf16.msra.mxu0 %v509
    %609 = vmatprep.subr.bf16.mxu0 0
    %610 = vmatpush1.bf16.msra.mxu0 %v506
    %611 = vmatprep.subr.bf16.mxu0 0
    %612 = vmatpush1.bf16.msra.mxu0 %v503
    %613 = vmatprep.subr.bf16.mxu0 0
    %614 = vmatpush1.bf16.msra.mxu0 %v500
    %615 = vmatprep.subr.bf16.mxu0 0
    %616 = vmatpush2.bf16.msra.mxu0 0
    %617 = vmatprep.subr.bf16.mxu0 0
    %618 = vmatpush2.bf16.msra.mxu0 0
    %619 = vmatprep.subr.bf16.mxu0 0
    %620 = vmatpush2.bf16.msra.mxu0 0
    %621 = vmatprep.subr.bf16.mxu0 0
    %622 = vmatpush2.bf16.msra.mxu0 0
    %623 = vmatprep.subr.bf16.mxu0 0
    %624 = vmatpush2.bf16.msra.mxu0 0
    %625 = vmatprep.subr.bf16.mxu0 0
    %626 = vmatpush2.bf16.msra.mxu0 0
    %627 = vmatprep.subr.bf16.mxu0 0
    %628 = vmatpush2.bf16.msra.mxu0 0
    %629 = vmatprep.subr.bf16.mxu0 0
    %630 = vmatpush2.bf16.msra.mxu0 0
    %631 = vmatprep.mubr.bf16.mxu0 0
    %632 = vmatmul.mubr.bf16.gmra.mxu0 %v384
    %v633 = vpop.f32.mrf.mxu0
    %v634 = vadd.f32 0.0, %v633
    %v635 = vpop.f32.mrf.mxu0
    %v636 = vpop.f32.mrf.mxu0
    %v637 = vadd.f32 0.0, %v636
    %v638 = vpop.f32.mrf.mxu0
    %639 = vmatprep.mubr.bf16.mxu0 0
    %640 = vmatmul.mubr.bf16.gmra.mxu0 %v385
    %v641 = vpop.f32.mrf.mxu0
    %v642 = vadd.f32 0.0, %v641
    %v643 = vpop.f32.mrf.mxu0
    %v644 = vpop.f32.mrf.mxu0
    %v645 = vadd.f32 0.0, %v644
    %v646 = vpop.f32.mrf.mxu0
    %647 = vdwg.mxu0
    %648 = vst [vmem:[#allocation2] sm:$0x1] 0.0
    %649 = vst [vmem:[#allocation2 + $0x1] sm:$0xff] %v581
    %650 = vst [vmem:[#allocation2 + $0x9] sm:$0xff] %v585
    %651 = vst [vmem:[#allocation2 + $0x11] sm:$0xff] %v591
    %652 = vst [vmem:[#allocation2 + $0x19] sm:$0x7f] %v595
    %v653 = vld [vmem:[#allocation2] sm:$0xff]
    %v654 = vld [vmem:[#allocation2 + $0x8] sm:$0xff]
    %v655 = vld [vmem:[#allocation2 + $0x10] sm:$0xff]
    %v656 = vld [vmem:[#allocation2 + $0x18] sm:$0xff]
    %v657 = vsel %vm116, %v653, 0.0
    %v658 = vsel %vm117, %v654, 0.0
    %v659 = vsel %vm118, %v655, 0.0
    %v660 = vsel %vm119, %v656, 0.0
    %v661 = vadd.f32 %v583, %v657
    %v662 = vadd.f32 %v587, %v658
    %v663 = vadd.f32 %v593, %v659
    %v664 = vadd.f32 %v597, %v660
    %665 = vst [vmem:[#allocation2 + $0x1f] sm:$0x1] 0.0
    %666 = vst [vmem:[#allocation2 - $0x1] sm:$0xfe] %v634
    %667 = vst [vmem:[#allocation2 + $0x7] sm:$0xff] %v637
    %668 = vst [vmem:[#allocation2 + $0xf] sm:$0xff] %v642
    %669 = vst [vmem:[#allocation2 + $0x17] sm:$0xff] %v645
    %v670 = vld [vmem:[#allocation2] sm:$0xff]
    %v671 = vld [vmem:[#allocation2 + $0x8] sm:$0xff]
    %v672 = vld [vmem:[#allocation2 + $0x10] sm:$0xff]
    %v673 = vld [vmem:[#allocation2 + $0x18] sm:$0xff]
    %v674 = vsel %vm120, %v670, 0.0
    %v675 = vsel %vm121, %v671, 0.0
    %v676 = vsel %vm122, %v672, 0.0
    %v677 = vsel %vm123, %v673, 0.0
    %v678 = vadd.f32 %v661, %v674
    %v679 = vadd.f32 %v662, %v675
    %v680 = vadd.f32 %v663, %v676
    %v681 = vadd.f32 %v664, %v677
    %v682 = vld [vmem:[%s4] sm:$0x1]
    %v684 = vlaneseq
    %v685 = vshrl.u32 %v684, 7
    %v686 = vsub.s32 0, %v685
    %v687 = vrot.slane %v682, %v686
    %v689 = vadd.f32 %v678, %v687
    %v690 = vadd.f32 %v679, %v687
    %v691 = vadd.f32 %v680, %v687
    %v692 = vadd.f32 %v681, %v687
    %vm693 = vcmp.ge.f32.partialorder %v689, 0.0
    %vm694 = vcmp.ge.f32.partialorder %v690, 0.0
    %vm695 = vcmp.ge.f32.partialorder %v691, 0.0
    %vm696 = vcmp.ge.f32.partialorder %v692, 0.0
    %v697 = vmul.f32 %v689, 0.01
    %v698 = vmul.f32 %v690, 0.01
    %v699 = vmul.f32 %v691, 0.01
    %v700 = vmul.f32 %v692, 0.01
    %v701 = vsel %vm693, %v689, %v697
    %v702 = vsel %vm694, %v690, %v698
    %v703 = vsel %vm695, %v691, %v699
    %v704 = vsel %vm696, %v692, %v700
    %705 = vst [vmem:[#allocation9] sm:$0xff] %v701
    %706 = vst [vmem:[#allocation9 + $0x8] sm:$0xff] %v702
    %707 = vst [vmem:[#allocation9 + $0x10] sm:$0xff] %v703
    %708 = vst [vmem:[#allocation9 + $0x18] sm:$0xff] %v704
    // Predicated region
    $region34: #{tpu_custom_call.1} parent=1 // pred_check
      _
    $region35: #{tpu_custom_call.1} parent=1 // pred_check_branch
      %710 = sbr.rel (0) target = $region37
    $region36: #{tpu_custom_call.1} parent=1 // pred_region
      %s712 = ssub.s32 512, 512
      %713 = vsyncadd [#allocation5], %s712
      %s714 = sshll.u32 [#allocation9], 4
      %s715 = int_to_ptr.vmem [resolvable:$true] %s714
      %720 = dma.vmem_to_hbm [thread:$0]  %s715, 512, %s5, [#allocation5], 128, 128, 8
    $region37: #{tpu_custom_call.1} parent=1 // pred_fallthru
      _
    // Predicated region
    $region38: #{tpu_custom_call.1} parent=1 // pred_check
      _
    $region39: #{tpu_custom_call.1} parent=1 // pred_check_branch
      %722 = sbr.rel (0) target = $region41
    $region40: #{tpu_custom_call.1} parent=1 // pred_region
      %723 = dma.done [#allocation5], 512
    $region41: #{tpu_custom_call.1} parent=1 // pred_fallthru
      _
    %724 = vsyncpa [#allocation4], 1
    %725 = vsyncpa [#allocation7], 1
    %726 = vsyncpa [#allocation5], 1

</llo_original>
